<compile_context>
chip_gen: v6e
topology: v6e:2x2x1
jax: 0.10.0
libtpu: 0.0.40
codegen_flags: <defaults>
</compile_context>

<pallas_src>
import jax
import jax.numpy as jnp
from jax.experimental import pallas as pl
from jax.experimental.pallas import tpu as pltpu


def _triplet_loss_kernel(a_dna_ref, p_dna_ref, n_dna_ref, a_vis_ref, losses_ref):
    a_dna = a_dna_ref[...].astype(jnp.float32)
    p_dna = p_dna_ref[...].astype(jnp.float32)
    n_dna = n_dna_ref[...].astype(jnp.float32)
    a_vis = a_vis_ref[...].astype(jnp.float32)

    # ap_distances  = (anchor_DNA - pos_DNA).pow(2).sum(1)
    ap1 = jnp.sum((a_dna - p_dna) ** 2, axis=1, keepdims=True)
    # ap_distances2 = (anchor_vis - anchor_DNA).pow(2).sum(1)
    ap2 = jnp.sum((a_vis - a_dna) ** 2, axis=1, keepdims=True)
    # Recip_an_distances = 1 / (anchor_DNA - neg_DNA).pow(2).sum(1)
    an1 = pl.reciprocal(jnp.sum((a_dna - n_dna) ** 2, axis=1, keepdims=True),
                        approx=True)
    # Recip_an_distances2 = 1 / (anchor_vis - anchor_vis).pow(2).sum(1)
    # == 1/0 == +inf exactly; emit the constant instead of a dead pass over a_vis.
    an2 = jnp.full_like(ap1, jnp.inf)

    losses_ref[...] = ap1 + ap2 + an1 + an2  # [TB, 1]


def _pad_rows(x, rows):
    b = x.shape[0]
    if rows == b:
        return x
    return jnp.pad(x, ((0, rows - b), (0, 0)))


def triplet_loss_forward(anchor_embed_DNA, pos_embed_DNA, neg_embed_DNA,
                         anchor_embed_vis, pos_embed_vis, neg_embed_vis,
                         preds, labels, labels_neg,
                         margin=0.0, lambda_factor=0.01,
                         block_rows=512):
    """Mirrors TripletLoss.forward (num_triplets == 0 path).

    Returns (loss_total, triplet_losses.mean(), loss_softmax, triplet_losses).
    """
    # pos_embed_vis / neg_embed_vis / preds / labels feed tensors the original
    # forward builds but never uses in the returned values (dead glue).
    del preds, labels, labels_neg, pos_embed_vis, neg_embed_vis
    del margin, lambda_factor  # unused on the num_triplets == 0 path

    B, D = anchor_embed_DNA.shape

    # Tile rows: multiple of 8 (sublane), capped at block_rows; pad batch so
    # every block is full (tail rows discarded in the wrapper).
    b_sub = 8 * pl.cdiv(B, 8)
    TB = min(block_rows, b_sub)
    Bp = TB * pl.cdiv(B, TB)
    grid = (Bp // TB,)

    inputs = tuple(_pad_rows(x, Bp) for x in
                   (anchor_embed_DNA, pos_embed_DNA, neg_embed_DNA,
                    anchor_embed_vis))

    losses_padded = pl.pallas_call(
        _triplet_loss_kernel,
        out_shape=jax.ShapeDtypeStruct((Bp, 1), jnp.float32),
        grid=grid,
        in_specs=[pl.BlockSpec((TB, D), lambda i: (i, 0))] * 4,
        out_specs=pl.BlockSpec((TB, 1), lambda i: (i, 0)),
        compiler_params=pltpu.CompilerParams(
            dimension_semantics=("parallel",)),
    )(*inputs)

    triplet_losses = losses_padded[:B, 0]      # per-sample losses, shape [B]
    loss_total = jnp.mean(triplet_losses)      # mean done in wrapper (cheap)
    loss_softmax = 1                           # hard-coded in the torch module
    return loss_total, loss_total, loss_softmax, triplet_losses


if __name__ == "__main__":
    key = jax.random.PRNGKey(0)
    B, D, C = 2, 32, 10
    keys = jax.random.split(key, 9)

    anchor_embed_DNA = jax.random.normal(keys[0], (B, D), dtype=jnp.float32)
    pos_embed_DNA    = jax.random.normal(keys[1], (B, D), dtype=jnp.float32)
    neg_embed_DNA    = jax.random.normal(keys[2], (B, D), dtype=jnp.float32)
    anchor_embed_vis = jax.random.normal(keys[3], (B, D), dtype=jnp.float32)
    pos_embed_vis    = jax.random.normal(keys[4], (B, D), dtype=jnp.float32)
    neg_embed_vis    = jax.random.normal(keys[5], (B, D), dtype=jnp.float32)
    preds            = jax.random.normal(keys[6], (3 * B, C), dtype=jnp.float32)
    labels           = jax.random.randint(keys[7], (B,), 0, C, dtype=jnp.int32)
    labels_neg       = jax.random.randint(keys[8], (B,), 0, C, dtype=jnp.int32)

    loss_total, loss_mean, loss_softmax, per_sample = triplet_loss_forward(
        anchor_embed_DNA, pos_embed_DNA, neg_embed_DNA,
        anchor_embed_vis, pos_embed_vis, neg_embed_vis,
        preds, labels, labels_neg)

    jax.block_until_ready((loss_total, loss_mean, per_sample))
    # Note: loss is +inf by construction (1 / ||a_vis - a_vis||^2), exactly as
    # in the original PyTorch module.
    print("KERNEL_OK")
</pallas_src>

<mosaic_0001>
module attributes {stable_mosaic.version = 11 : i64} {
  func.func @_triplet_loss_kernel(%arg0: i32, %arg1: memref<8x32xf32, #tpu.memory_space<vmem>>, %arg2: memref<8x32xf32, #tpu.memory_space<vmem>>, %arg3: memref<8x32xf32, #tpu.memory_space<vmem>>, %arg4: memref<8x32xf32, #tpu.memory_space<vmem>>, %arg5: memref<8x1xf32, #tpu.memory_space<vmem>>) attributes {dimension_semantics = [#tpu.dimension_semantics<parallel>], iteration_bounds = array<i64: 1>, scalar_prefetch = 0 : i64, scratch_operands = 0 : i64, tpu.core_type = #tpu.core_type<tc>, window_params = [{transform_indices = @transform_0, window_bounds = array<i64: 8, 32>}, {transform_indices = @transform_1, window_bounds = array<i64: 8, 32>}, {transform_indices = @transform_2, window_bounds = array<i64: 8, 32>}, {transform_indices = @transform_3, window_bounds = array<i64: 8, 32>}, {transform_indices = @transform_4, window_bounds = array<i64: 8, 1>}]} {
    %c0 = arith.constant 0 : index
    %c0_0 = arith.constant 0 : index
    %0 = vector.load %arg1[%c0, %c0_0] : memref<8x32xf32, #tpu.memory_space<vmem>>, vector<8x32xf32>
    %c0_1 = arith.constant 0 : index
    %c0_2 = arith.constant 0 : index
    %1 = vector.load %arg2[%c0_1, %c0_2] : memref<8x32xf32, #tpu.memory_space<vmem>>, vector<8x32xf32>
    %c0_3 = arith.constant 0 : index
    %c0_4 = arith.constant 0 : index
    %2 = vector.load %arg3[%c0_3, %c0_4] : memref<8x32xf32, #tpu.memory_space<vmem>>, vector<8x32xf32>
    %c0_5 = arith.constant 0 : index
    %c0_6 = arith.constant 0 : index
    %3 = vector.load %arg4[%c0_5, %c0_6] : memref<8x32xf32, #tpu.memory_space<vmem>>, vector<8x32xf32>
    %4 = arith.subf %0, %1 : vector<8x32xf32>
    %5 = arith.mulf %4, %4 : vector<8x32xf32>
    %cst = arith.constant dense<0.000000e+00> : vector<8xf32>
    %6 = vector.multi_reduction <add>, %5, %cst [1] : vector<8x32xf32> to vector<8xf32>
    %7 = vector.shape_cast %6 : vector<8xf32> to vector<8x1xf32>
    %8 = arith.subf %3, %0 : vector<8x32xf32>
    %9 = arith.mulf %8, %8 : vector<8x32xf32>
    %cst_7 = arith.constant dense<0.000000e+00> : vector<8xf32>
    %10 = vector.multi_reduction <add>, %9, %cst_7 [1] : vector<8x32xf32> to vector<8xf32>
    %11 = vector.shape_cast %10 : vector<8xf32> to vector<8x1xf32>
    %12 = arith.subf %0, %2 : vector<8x32xf32>
    %13 = arith.mulf %12, %12 : vector<8x32xf32>
    %cst_8 = arith.constant dense<0.000000e+00> : vector<8xf32>
    %14 = vector.multi_reduction <add>, %13, %cst_8 [1] : vector<8x32xf32> to vector<8xf32>
    %15 = vector.shape_cast %14 : vector<8xf32> to vector<8x1xf32>
    %16 = tpu.reciprocal %15 {approx = true} : vector<8x1xf32> -> vector<8x1xf32>
    %cst_9 = arith.constant 0x7F800000 : f32
    %17 = vector.broadcast %cst_9 : f32 to vector<8x1xf32>
    %18 = arith.addf %7, %11 : vector<8x1xf32>
    %19 = arith.addf %18, %16 : vector<8x1xf32>
    %20 = arith.addf %19, %17 : vector<8x1xf32>
    %c0_10 = arith.constant 0 : index
    %c0_11 = arith.constant 0 : index
    %21 = vector.load %arg5[%c0_10, %c0_11] : memref<8x1xf32, #tpu.memory_space<vmem>>, vector<8x1xf32>
    tpu.vector_store %arg5[%c0_10, %c0_11], %20 {strides = array<i32>} : memref<8x1xf32, #tpu.memory_space<vmem>>, vector<8x1xf32>,
    return
  }
  func.func @transform_0(%arg0: i32) -> (i32, i32) {
    %c0_i32 = arith.constant 0 : i32
    %c0_i32_0 = arith.constant 0 : i32
    return %arg0, %c0_i32 : i32, i32
  }
  func.func @transform_1(%arg0: i32) -> (i32, i32) {
    %c0_i32 = arith.constant 0 : i32
    %c0_i32_0 = arith.constant 0 : i32
    return %arg0, %c0_i32 : i32, i32
  }
  func.func @transform_2(%arg0: i32) -> (i32, i32) {
    %c0_i32 = arith.constant 0 : i32
    %c0_i32_0 = arith.constant 0 : i32
    return %arg0, %c0_i32 : i32, i32
  }
  func.func @transform_3(%arg0: i32) -> (i32, i32) {
    %c0_i32 = arith.constant 0 : i32
    %c0_i32_0 = arith.constant 0 : i32
    return %arg0, %c0_i32 : i32, i32
  }
  func.func @transform_4(%arg0: i32) -> (i32, i32) {
    %c0_i32 = arith.constant 0 : i32
    %c0_i32_0 = arith.constant 0 : i32
    return %arg0, %c0_i32 : i32, i32
  }
}

</mosaic_0001>

<llo_original>
// kernel: tpu_custom_call.1
$region0: #{tpu_custom_call.1}
  #allocation0 [shape = 'u32[]', space=smem, size = 0x4, offset = 0x4, fixed_abs, tag = 'smem constant byte address 0x4 - core index']
  #allocation1 [shape = 'u32[144,128]{1,0:T(1,128)}', space=vmem, size = 0x12000, scoped, tag = 'internal scratch']
  %s0 = inlined_call_operand.hbm [shape: f32[8,32], index: 0, kind: input, shape index: {}]
  %s1 = inlined_call_operand.hbm [shape: f32[8,32], index: 1, kind: input, shape index: {}]
  %s2 = inlined_call_operand.hbm [shape: f32[8,32], index: 2, kind: input, shape index: {}]
  %s3 = inlined_call_operand.hbm [shape: f32[8,32], index: 3, kind: input, shape index: {}]
  %s4 = inlined_call_operand.vmem [shape: f32[8,1], index: 4, kind: output, shape index: {}]
  %s5 = sld [smem:[#allocation0]]
  $region42: #{tpu_custom_call.1} parent=0
    _
  %s7 = ssub.s32 1, %s5
  %s8 = scalar_select 0, %s7, %s5
  $region1: #{tpu_custom_call.1} parent=0
    #allocation2 [shape = 'u8[4096]{0}', space=vmem, size = 0x1000, scoped, tag = 'input window, operand 0, single buffered']
    #allocation3 [shape = 's32[1]{0}', space=sflag, size = 0x4, scoped, tag = 'scoped memory for tpu_custom_call.1']
    #allocation4 [shape = 'u8[4096]{0}', space=vmem, size = 0x1000, scoped, tag = 'input window, operand 1, single buffered']
    #allocation5 [shape = 's32[1]{0}', space=sflag, size = 0x4, scoped, tag = 'scoped memory for tpu_custom_call.1']
    #allocation6 [shape = 'u8[4096]{0}', space=vmem, size = 0x1000, scoped, tag = 'input window, operand 2, single buffered']
    #allocation7 [shape = 'u8[4096]{0}', space=vmem, size = 0x1000, scoped, tag = 'input window, operand 3, single buffered']
    #allocation8 [shape = 's32[1]{0}', space=sflag, size = 0x4, scoped, tag = 'scoped memory for tpu_custom_call.1']
    %9 = vsyncpa [#allocation3], 0
    %10 = vsyncpa [#allocation5], 0
    %11 = vsyncpa [#allocation8], 0
    // Predicated region
    $region2: #{tpu_custom_call.1} parent=1 // pred_check
      _
    $region3: #{tpu_custom_call.1} parent=1 // pred_check_branch
      %13 = sbr.rel (0) target = $region5
    $region4: #{tpu_custom_call.1} parent=1 // pred_region
      %s15 = ssub.s32 128, 128
      %16 = vsyncadd [#allocation3], %s15
      %s18 = sshll.u32 [#allocation2], 4
      %s19 = int_to_ptr.vmem [resolvable:$true] %s18
      %21 = dma.hbm_to_vmem [thread:$0]  %s0, 128, %s19, [#allocation3]
    $region5: #{tpu_custom_call.1} parent=1 // pred_fallthru
      _
    // Predicated region
    $region6: #{tpu_custom_call.1} parent=1 // pred_check
      _
    $region7: #{tpu_custom_call.1} parent=1 // pred_check_branch
      %23 = sbr.rel (0) target = $region9
    $region8: #{tpu_custom_call.1} parent=1 // pred_region
      %s25 = ssub.s32 128, 128
      %26 = vsyncadd [#allocation5], %s25
      %s28 = sshll.u32 [#allocation4], 4
      %s29 = int_to_ptr.vmem [resolvable:$true] %s28
      %31 = dma.hbm_to_vmem [thread:$0]  %s1, 128, %s29, [#allocation5]
    $region9: #{tpu_custom_call.1} parent=1 // pred_fallthru
      _
    // Predicated region
    $region10: #{tpu_custom_call.1} parent=1 // pred_check
      _
    $region11: #{tpu_custom_call.1} parent=1 // pred_check_branch
      %33 = sbr.rel (0) target = $region13
    $region12: #{tpu_custom_call.1} parent=1 // pred_region
      %s35 = ssub.s32 128, 128
      %36 = vsyncadd [#allocation5], %s35
      %s38 = sshll.u32 [#allocation6], 4
      %s39 = int_to_ptr.vmem [resolvable:$true] %s38
      %41 = dma.hbm_to_vmem [thread:$0]  %s2, 128, %s39, [#allocation5]
    $region13: #{tpu_custom_call.1} parent=1 // pred_fallthru
      _
    // Predicated region
    $region14: #{tpu_custom_call.1} parent=1 // pred_check
      _
    $region15: #{tpu_custom_call.1} parent=1 // pred_check_branch
      %43 = sbr.rel (0) target = $region17
    $region16: #{tpu_custom_call.1} parent=1 // pred_region
      %s45 = ssub.s32 128, 128
      %46 = vsyncadd [#allocation8], %s45
      %s48 = sshll.u32 [#allocation7], 4
      %s49 = int_to_ptr.vmem [resolvable:$true] %s48
      %51 = dma.hbm_to_vmem [thread:$0]  %s3, 128, %s49, [#allocation8]
    $region17: #{tpu_custom_call.1} parent=1 // pred_fallthru
      _
    // Predicated region
    $region18: #{tpu_custom_call.1} parent=1 // pred_check
      _
    $region19: #{tpu_custom_call.1} parent=1 // pred_check_branch
      %53 = sbr.rel (0) target = $region21
    $region20: #{tpu_custom_call.1} parent=1 // pred_region
      %54 = dma.done [#allocation3], 128
    $region21: #{tpu_custom_call.1} parent=1 // pred_fallthru
      _
    // Predicated region
    $region22: #{tpu_custom_call.1} parent=1 // pred_check
      _
    $region23: #{tpu_custom_call.1} parent=1 // pred_check_branch
      %56 = sbr.rel (0) target = $region25
    $region24: #{tpu_custom_call.1} parent=1 // pred_region
      %57 = dma.done [#allocation5], 128
    $region25: #{tpu_custom_call.1} parent=1 // pred_fallthru
      _
    // Predicated region
    $region26: #{tpu_custom_call.1} parent=1 // pred_check
      _
    $region27: #{tpu_custom_call.1} parent=1 // pred_check_branch
      %59 = sbr.rel (0) target = $region29
    $region28: #{tpu_custom_call.1} parent=1 // pred_region
      %60 = dma.done [#allocation5], 128
    $region29: #{tpu_custom_call.1} parent=1 // pred_fallthru
      _
    // Predicated region
    $region30: #{tpu_custom_call.1} parent=1 // pred_check
      _
    $region31: #{tpu_custom_call.1} parent=1 // pred_check_branch
      %62 = sbr.rel (0) target = $region33
    $region32: #{tpu_custom_call.1} parent=1 // pred_region
      %63 = dma.done [#allocation8], 128
    $region33: #{tpu_custom_call.1} parent=1 // pred_fallthru
      _
    %v64 = vld [vmem:[#allocation2] sm:$0xff]
    %v65 = vld [vmem:[#allocation4] sm:$0xff]
    %v66 = vld [vmem:[#allocation6] sm:$0xff]
    %v67 = vld [vmem:[#allocation7] sm:$0xff]
    %v68 = vsub.f32 %v64, %v65
    %v69 = vmul.f32 %v68, %v68
    %vm70 = vcmask 261120
    %v71 = vsel %vm70, %v69, 0.0
    %72 = vadd.xlane.f32.xlu0 %v71
    %v73 = vpop.xlane.xlu0 %72
    %v74 = vsub.f32 %v67, %v64
    %v75 = vmul.f32 %v74, %v74
    %v76 = vsel %vm70, %v75, 0.0
    %77 = vadd.xlane.f32.xlu0 %v76
    %v78 = vpop.xlane.xlu0 %77
    %v79 = vsub.f32 %v64, %v66
    %v80 = vmul.f32 %v79, %v79
    %v81 = vsel %vm70, %v80, 0.0
    %82 = vadd.xlane.f32.xlu0 %v81
    %v83 = vpop.xlane.xlu0 %82
    %v84 = vrcp.pop %v83
    %v85 = vadd.f32 %v73, %v78
    %v86 = vadd.f32 %v85, %v84
    %v87 = vadd.f32 %v86, inf
    %vm88 = vcmask 7168
    %89 = vst.msk [vmem:[%s4] sm:$0xff] %vm88, %v87
    // Predicated region
    $region34: #{tpu_custom_call.1} parent=1 // pred_check
      _
    $region35: #{tpu_custom_call.1} parent=1 // pred_check_branch
      %91 = sbr.rel (0) target = $region37
    $region36: #{tpu_custom_call.1} parent=1 // pred_region
      _
    $region37: #{tpu_custom_call.1} parent=1 // pred_fallthru
      _
    // Predicated region
    $region38: #{tpu_custom_call.1} parent=1 // pred_check
      _
    $region39: #{tpu_custom_call.1} parent=1 // pred_check_branch
      %93 = sbr.rel (0) target = $region41
    $region40: #{tpu_custom_call.1} parent=1 // pred_region
      _
    $region41: #{tpu_custom_call.1} parent=1 // pred_fallthru
      _
    %94 = vsyncpa [#allocation3], 1
    %95 = vsyncpa [#allocation5], 1
    %96 = vsyncpa [#allocation8], 1

</llo_original>
